<compile_context>
chip_gen: v5e
topology: v5e:2x2
jax: 0.10.0
libtpu: 0.0.40
codegen_flags: <defaults>
</compile_context>

<pallas_src>
import jax
import jax.numpy as jnp
from jax.experimental import pallas as pl
from jax.experimental.pallas import tpu as pltpu


def _make_kernel(TB, L, H, scale, fuse_kv):
    """Build the kernel body, closing over static tile sizes / structure."""

    def kernel(*refs):
        if fuse_kv:
            (vl_ref, h_ref, wq_ref, wkv_ref,
             wp_ref, bp_ref, wc_ref, bc_ref, out_ref) = refs
        else:
            (vl_ref, h_ref, wq_ref, wk_ref, wv_ref,
             wp_ref, bp_ref, wc_ref, bc_ref, out_ref) = refs

        h = h_ref[...]                                   # (TB, L, H) compute dtype
        cdt = h.dtype

        # ---- gen_attention_mask: key_mask[r, :valid_length[r]] = True --------
        # One vector compare against the (TB, 1) valid-length column.
        # valid_length == 0 yields uniform attention (matches the JAX reference).
        pos = jax.lax.broadcasted_iota(jnp.int32, (TB, L), 1)
        key_mask = pos < vl_ref[...]                     # (TB, L) bool

        # ---- K/V projections: bf16 MXU operands, f32 accumulation ------------
        h_flat = h.reshape(TB * L, H)
        if fuse_kv:
            kv = jnp.dot(h_flat, wkv_ref[...],
                         preferred_element_type=jnp.float32)
            kv = kv.astype(cdt).reshape(TB, L, 2 * H)
            k = kv[:, :, :H]                             # lane-aligned (H % 128 == 0)
            v = kv[:, :, H:]
        else:
            k = jnp.dot(h_flat, wk_ref[...],
                        preferred_element_type=jnp.float32).astype(cdt)
            v = jnp.dot(h_flat, wv_ref[...],
                        preferred_element_type=jnp.float32).astype(cdt)
            k = k.reshape(TB, L, H)
            v = v.reshape(TB, L, H)

        # ---- CLS-row-only query & masked attention ---------------------------
        cls = h[:, 0, :]                                 # (TB, H)
        q = jnp.dot(cls, wq_ref[...],
                    preferred_element_type=jnp.float32)  # (TB, H) f32

        # Scores on the VPU/XLU (broadcast-multiply + reduce over H): avoids an
        # M=1 batched MXU matmul; softmax math stays f32 (no bf16 VPU on v5e).
        scores = jnp.sum(q[:, None, :] * k.astype(jnp.float32), axis=-1)  # (TB, L)
        scores = scores * jnp.float32(scale)
        scores = jnp.where(key_mask, scores, jnp.float32(-1e30))

        m = jnp.max(scores, axis=-1, keepdims=True)
        e = jnp.exp(scores - m)
        denom = jnp.sum(e, axis=-1, keepdims=True)
        probs = e * pl.reciprocal(denom, approx=True)    # (TB, L) f32

        # ctx accumulation on the MXU: bf16 operands, f32 accumulation.
        ctx = jnp.einsum('bqk,bkh->bqh', probs[:, None, :].astype(cdt), v,
                         preferred_element_type=jnp.float32)
        ctx = ctx.reshape(TB, H)                         # (TB, H) f32

        # ---- BERT pooler: tanh(ctx_CLS @ Wp + bp) (f32 elementwise) ----------
        pooled = jnp.tanh(
            jnp.dot(ctx.astype(cdt), wp_ref[...],
                    preferred_element_type=jnp.float32) + bp_ref[...])

        # dr_rate is None -> no dropout (inference path of the module).

        # ---- classifier: Linear(hidden, num_classes), lane-dense output ------
        logits = (jnp.dot(pooled.astype(cdt), wc_ref[...],
                          preferred_element_type=jnp.float32) + bc_ref[...])
        out_ref[...] = logits                            # (TB, C_pad) f32

    return kernel


def _padded_block_bytes(shape, dtype):
    """Rough VMEM footprint of one block ((8,128)-tile padding on last two dims)."""
    shape = tuple(shape)
    if len(shape) == 1:
        shape = (1,) + shape
    lead = 1
    for d in shape[:-2]:
        lead *= d
    s = ((shape[-2] + 7) // 8) * 8
    l = ((shape[-1] + 127) // 128) * 128
    return lead * s * l * jnp.dtype(dtype).itemsize


def bert_classifier_forward(valid_length, hidden, wq, wk, wv, wp, bp, wc, bc,
                            *, rows_per_step=None, compute_dtype=jnp.bfloat16):
    """hidden: (B, L, H) f32 embeddings; valid_length: (B,) int. Returns (B, C) f32 logits."""
    B, L, H = hidden.shape
    C = wc.shape[1]
    C_pad = ((C + 127) // 128) * 128                 # lane-dense classifier output

    # Toy sizes: whole batch per step -> grid=(1,), no per-step pipeline overhead.
    # Real sizes: ~128 (v5e) / 256 (v6e/v7x) rows per step to fill the MXU M-dim.
    TB = rows_per_step if rows_per_step is not None else min(B, 256)
    assert B % TB == 0, "batch must be divisible by rows_per_step"
    assert TB % 8 == 0 or TB == B, "TB must be a multiple of 8 or equal to B"

    cdt = compute_dtype
    fuse_kv = (H % 128 == 0)         # lane-aligned kv split only at real BERT widths

    h_c = hidden.astype(cdt)
    vl2d = valid_length.astype(jnp.int32).reshape(B, 1)
    wq_c = wq.astype(cdt)
    if fuse_kv:
        kv_weights = (jnp.concatenate([wk, wv], axis=1).astype(cdt),)
        kv_specs = [pl.BlockSpec((H, 2 * H), lambda b: (0, 0))]
        kv_block_bytes = _padded_block_bytes((H, 2 * H), cdt)
    else:
        kv_weights = (wk.astype(cdt), wv.astype(cdt))
        kv_specs = [pl.BlockSpec((H, H), lambda b: (0, 0)),
                    pl.BlockSpec((H, H), lambda b: (0, 0))]
        kv_block_bytes = 2 * _padded_block_bytes((H, H), cdt)
    wp_c = wp.astype(cdt)
    wc_p = jnp.zeros((H, C_pad), cdt).at[:, :C].set(wc.astype(cdt))
    bp_f = bp.astype(jnp.float32).reshape(1, H)
    bc_p = jnp.zeros((1, C_pad), jnp.float32).at[:, :C].set(bc.astype(jnp.float32))

    scale = float(1.0 / (H ** 0.5))
    kernel = _make_kernel(TB, L, H, scale, fuse_kv)

    in_specs = [
        pl.BlockSpec((TB, 1), lambda b: (b, 0)),             # valid_length column
        pl.BlockSpec((TB, L, H), lambda b: (b, 0, 0)),        # hidden rows
        pl.BlockSpec((H, H), lambda b: (0, 0)),               # wq (grid-invariant)
        *kv_specs,                                            # wk/wv or fused wkv
        pl.BlockSpec((H, H), lambda b: (0, 0)),               # wp
        pl.BlockSpec((1, H), lambda b: (0, 0)),               # bp (f32)
        pl.BlockSpec((H, C_pad), lambda b: (0, 0)),           # wc (lane-padded)
        pl.BlockSpec((1, C_pad), lambda b: (0, 0)),           # bc (lane-padded, f32)
    ]
    out_specs = pl.BlockSpec((TB, C_pad), lambda b: (b, 0))
    inputs = (vl2d, h_c, wq_c, *kv_weights, wp_c, bp_f, wc_p, bc_p)

    # Explicit VMEM budget: 2x-buffered blocks + in-kernel f32 temporaries.
    block_bytes = (
        _padded_block_bytes((TB, 1), jnp.int32)
        + _padded_block_bytes((TB, L, H), cdt)
        + _padded_block_bytes((H, H), cdt)                    # wq
        + kv_block_bytes
        + _padded_block_bytes((H, H), cdt)                    # wp
        + _padded_block_bytes((1, H), jnp.float32)            # bp
        + _padded_block_bytes((H, C_pad), cdt)                # wc
        + _padded_block_bytes((1, C_pad), jnp.float32)        # bc
        + _padded_block_bytes((TB, C_pad), jnp.float32)       # out
    )
    temp_bytes = 6 * TB * L * ((H + 127) // 128) * 128 * 4    # k/v/score/prob temps
    vmem_limit = int(min(max(2 * block_bytes + temp_bytes + (4 << 20), 16 << 20),
                         48 << 20))

    # TODO(synk): at real BERT sizes (H=768, L=512) stream the sequence dim with
    # an inner online-softmax loop (emit_pipeline / extra 'arbitrary' grid axis),
    # single-buffer the grid-invariant weight blocks, and on v7x shard the batch
    # grid axis across the two TensorCores (core-parallel semantics / core_map).
    out = pl.pallas_call(
        kernel,
        out_shape=jax.ShapeDtypeStruct((B, C_pad), jnp.float32),
        grid_spec=pltpu.PrefetchScalarGridSpec(
            num_scalar_prefetch=0,
            grid=(B // TB,),
            in_specs=in_specs,
            out_specs=out_specs,
        ),
        compiler_params=pltpu.CompilerParams(
            dimension_semantics=("parallel",),
            vmem_limit_bytes=vmem_limit,
        ),
    )(*inputs)

    return out[:, :C]                                          # (B, C)


def _reference(valid_length, hidden, wq, wk, wv, wp, bp, wc, bc):
    """Pure-JAX f32 reference of the same synthetic forward (CLS-only attention)."""
    B, L, H = hidden.shape
    mask = jnp.arange(L)[None, :] < valid_length[:, None]      # (B, L)
    k = jnp.einsum('blh,hd->bld', hidden, wk)
    v = jnp.einsum('blh,hd->bld', hidden, wv)
    q = hidden[:, 0, :] @ wq                                   # (B, H)
    scores = jnp.einsum('bh,blh->bl', q, k) / jnp.sqrt(jnp.float32(H))
    scores = jnp.where(mask, scores, -1e30)
    probs = jax.nn.softmax(scores, axis=-1)
    ctx = jnp.einsum('bl,blh->bh', probs, v)
    pooled = jnp.tanh(ctx @ wp + bp)
    return pooled @ wc + bc


if __name__ == "__main__":
    # Small, BERT-classifier-consistent shapes. Whole batch per step -> grid=(1,).
    B, L, H, C, V = 16, 8, 32, 7, 64

    key = jax.random.PRNGKey(0)
    keys = jax.random.split(key, 13)

    # Module inputs (token_ids, valid_length, segment_ids)
    token_ids = jax.random.randint(keys[0], (B, L), 0, V, dtype=jnp.int32)
    segment_ids = jax.random.randint(keys[1], (B, L), 0, 2, dtype=jnp.int32)
    valid_length = jax.random.randint(keys[12], (B,), 1, L + 1, dtype=jnp.int32)

    # TODO(synk): the real pretrained BERT backbone is an external module; it is
    # replaced with a deterministic synthetic single-layer encoder + pooler here.
    tok_emb = jax.random.normal(keys[2], (V, H), jnp.float32) * 0.02
    seg_emb = jax.random.normal(keys[3], (2, H), jnp.float32) * 0.02
    pos_emb = jax.random.normal(keys[4], (L, H), jnp.float32) * 0.02
    wq = jax.random.normal(keys[5], (H, H), jnp.float32) * 0.05
    wk = jax.random.normal(keys[6], (H, H), jnp.float32) * 0.05
    wv = jax.random.normal(keys[7], (H, H), jnp.float32) * 0.05
    wp = jax.random.normal(keys[8], (H, H), jnp.float32) * 0.05
    bp = jax.random.normal(keys[9], (1, H), jnp.float32) * 0.01
    wc = jax.random.normal(keys[10], (H, C), jnp.float32) * 0.05  # classifier weight (in, out)
    bc = jax.random.normal(keys[11], (1, C), jnp.float32) * 0.01  # classifier bias

    # Glue (plain JAX): embedding lookups -> (B, L, H) hidden states.
    hidden = (tok_emb[token_ids] + seg_emb[segment_ids]
              + pos_emb[None, :, :]).astype(jnp.float32)

    logits = bert_classifier_forward(valid_length, hidden, wq, wk, wv, wp, bp, wc, bc)
    logits = jax.block_until_ready(logits)

    assert logits.shape == (B, C) and logits.dtype == jnp.float32

    ref = _reference(valid_length, hidden, wq, wk, wv, wp, bp, wc, bc)
    assert jnp.allclose(logits, ref, atol=2e-2, rtol=2e-2), (
        f"max abs err {jnp.max(jnp.abs(logits - ref))}")

    print("KERNEL_OK")
</pallas_src>

<mosaic_0001>
module attributes {stable_mosaic.version = 11 : i64} {
  func.func @kernel(%arg0: i32, %arg1: memref<16x1xi32, #tpu.memory_space<vmem>>, %arg2: memref<16x8x32xbf16, #tpu.memory_space<vmem>>, %arg3: memref<32x32xbf16, #tpu.memory_space<vmem>>, %arg4: memref<32x32xbf16, #tpu.memory_space<vmem>>, %arg5: memref<32x32xbf16, #tpu.memory_space<vmem>>, %arg6: memref<32x32xbf16, #tpu.memory_space<vmem>>, %arg7: memref<1x32xf32, #tpu.memory_space<vmem>>, %arg8: memref<32x128xbf16, #tpu.memory_space<vmem>>, %arg9: memref<1x128xf32, #tpu.memory_space<vmem>>, %arg10: memref<16x128xf32, #tpu.memory_space<vmem>>) attributes {dimension_semantics = [#tpu.dimension_semantics<parallel>], iteration_bounds = array<i64: 1>, scalar_prefetch = 0 : i64, scratch_operands = 0 : i64, tpu.core_type = #tpu.core_type<tc>, window_params = [{transform_indices = @transform_0, window_bounds = array<i64: 16, 1>}, {transform_indices = @transform_1, window_bounds = array<i64: 16, 8, 32>}, {pipeline_mode = #tpu.pipeline_mode<synchronous>, transform_indices = @transform_2, window_bounds = array<i64: 32, 32>}, {pipeline_mode = #tpu.pipeline_mode<synchronous>, transform_indices = @transform_3, window_bounds = array<i64: 32, 32>}, {pipeline_mode = #tpu.pipeline_mode<synchronous>, transform_indices = @transform_4, window_bounds = array<i64: 32, 32>}, {pipeline_mode = #tpu.pipeline_mode<synchronous>, transform_indices = @transform_5, window_bounds = array<i64: 32, 32>}, {pipeline_mode = #tpu.pipeline_mode<synchronous>, transform_indices = @transform_6, window_bounds = array<i64: 1, 32>}, {pipeline_mode = #tpu.pipeline_mode<synchronous>, transform_indices = @transform_7, window_bounds = array<i64: 32, 128>}, {pipeline_mode = #tpu.pipeline_mode<synchronous>, transform_indices = @transform_8, window_bounds = array<i64: 1, 128>}, {transform_indices = @transform_9, window_bounds = array<i64: 16, 128>}]} {
    %c0 = arith.constant 0 : index
    %c0_0 = arith.constant 0 : index
    %c0_1 = arith.constant 0 : index
    %0 = vector.load %arg2[%c0, %c0_0, %c0_1] : memref<16x8x32xbf16, #tpu.memory_space<vmem>>, vector<16x8x32xbf16>
    %1 = tpu.iota {dimensions = array<i32: 1>} : vector<16x8xi32>
    %c0_2 = arith.constant 0 : index
    %c0_3 = arith.constant 0 : index
    %2 = vector.load %arg1[%c0_2, %c0_3] : memref<16x1xi32, #tpu.memory_space<vmem>>, vector<16x1xi32>
    %3 = vector.broadcast %2 : vector<16x1xi32> to vector<16x8xi32>
    %4 = arith.cmpi slt, %1, %3 : vector<16x8xi32>
    %5 = vector.shape_cast %0 : vector<16x8x32xbf16> to vector<128x32xbf16>
    %c0_4 = arith.constant 0 : index
    %c0_5 = arith.constant 0 : index
    %6 = vector.load %arg4[%c0_4, %c0_5] : memref<32x32xbf16, #tpu.memory_space<vmem>>, vector<32x32xbf16>
    %cst = arith.constant dense<0.000000e+00> : vector<128x32xf32>
    %7 = tpu.matmul %5, %6, %cst {dimension_numbers = #tpu.dot_dimension_numbers<[1], [0], [0], [1], [0, 0, 1, 1], [], []>} : vector<128x32xbf16>, vector<32x32xbf16>, vector<128x32xf32> -> vector<128x32xf32>
    %8 = arith.truncf %7 : vector<128x32xf32> to vector<128x32xbf16>
    %c0_6 = arith.constant 0 : index
    %c0_7 = arith.constant 0 : index
    %9 = vector.load %arg5[%c0_6, %c0_7] : memref<32x32xbf16, #tpu.memory_space<vmem>>, vector<32x32xbf16>
    %cst_8 = arith.constant dense<0.000000e+00> : vector<128x32xf32>
    %10 = tpu.matmul %5, %9, %cst_8 {dimension_numbers = #tpu.dot_dimension_numbers<[1], [0], [0], [1], [0, 0, 1, 1], [], []>} : vector<128x32xbf16>, vector<32x32xbf16>, vector<128x32xf32> -> vector<128x32xf32>
    %11 = arith.truncf %10 : vector<128x32xf32> to vector<128x32xbf16>
    %12 = vector.shape_cast %8 : vector<128x32xbf16> to vector<16x8x32xbf16>
    %13 = vector.shape_cast %11 : vector<128x32xbf16> to vector<16x8x32xbf16>
    %14 = vector.extract_strided_slice %0 {offsets = [0, 0, 0], sizes = [16, 1, 32], strides = [1, 1, 1]} : vector<16x8x32xbf16> to vector<16x1x32xbf16>
    %15 = vector.shape_cast %14 : vector<16x1x32xbf16> to vector<16x32xbf16>
    %c0_9 = arith.constant 0 : index
    %c0_10 = arith.constant 0 : index
    %16 = vector.load %arg3[%c0_9, %c0_10] : memref<32x32xbf16, #tpu.memory_space<vmem>>, vector<32x32xbf16>
    %cst_11 = arith.constant dense<0.000000e+00> : vector<16x32xf32>
    %17 = tpu.matmul %15, %16, %cst_11 {dimension_numbers = #tpu.dot_dimension_numbers<[1], [0], [0], [1], [0, 0, 1, 1], [], []>} : vector<16x32xbf16>, vector<32x32xbf16>, vector<16x32xf32> -> vector<16x32xf32>
    %18 = vector.shape_cast %17 : vector<16x32xf32> to vector<16x1x32xf32>
    %19 = arith.extf %12 : vector<16x8x32xbf16> to vector<16x8x32xf32>
    %20 = vector.broadcast %18 : vector<16x1x32xf32> to vector<16x8x32xf32>
    %21 = arith.mulf %20, %19 : vector<16x8x32xf32>
    %cst_12 = arith.constant dense<0.000000e+00> : vector<16x8xf32>
    %22 = vector.multi_reduction <add>, %21, %cst_12 [2] : vector<16x8x32xf32> to vector<16x8xf32>
    %cst_13 = arith.constant 0.176776692 : f32
    %23 = vector.broadcast %cst_13 : f32 to vector<16x8xf32>
    %24 = arith.mulf %22, %23 : vector<16x8xf32>
    %cst_14 = arith.constant -1.000000e+30 : f32
    %25 = vector.broadcast %cst_14 : f32 to vector<16x8xf32>
    %26 = arith.select %4, %24, %25 : vector<16x8xi1>, vector<16x8xf32>
    %cst_15 = arith.constant dense<0xFF800000> : vector<16xf32>
    %27 = vector.multi_reduction <maximumf>, %26, %cst_15 [1] : vector<16x8xf32> to vector<16xf32>
    %28 = vector.shape_cast %27 : vector<16xf32> to vector<16x1xf32>
    %29 = vector.broadcast %28 : vector<16x1xf32> to vector<16x8xf32>
    %30 = arith.subf %26, %29 : vector<16x8xf32>
    %31 = math.exp %30 : vector<16x8xf32>
    %cst_16 = arith.constant dense<0.000000e+00> : vector<16xf32>
    %32 = vector.multi_reduction <add>, %31, %cst_16 [1] : vector<16x8xf32> to vector<16xf32>
    %33 = vector.shape_cast %32 : vector<16xf32> to vector<16x1xf32>
    %34 = tpu.reciprocal %33 {approx = true} : vector<16x1xf32> -> vector<16x1xf32>
    %35 = vector.broadcast %34 : vector<16x1xf32> to vector<16x8xf32>
    %36 = arith.mulf %31, %35 : vector<16x8xf32>
    %37 = vector.shape_cast %36 : vector<16x8xf32> to vector<16x1x8xf32>
    %38 = arith.truncf %37 : vector<16x1x8xf32> to vector<16x1x8xbf16>
    "tpu.trace_start"() <{level = 10 : i32, message = "bqk,bkh->bqh"}> : () -> ()
    %cst_17 = arith.constant dense<0.000000e+00> : vector<16x1x32xf32>
    %39 = tpu.matmul %38, %13, %cst_17 {dimension_numbers = #tpu.dot_dimension_numbers<[2], [1], [1], [2], [0, 0, 0, 1, 1, 2], [0], [0]>} : vector<16x1x8xbf16>, vector<16x8x32xbf16>, vector<16x1x32xf32> -> vector<16x1x32xf32>
    "tpu.trace_stop"() : () -> ()
    %40 = vector.shape_cast %39 : vector<16x1x32xf32> to vector<16x32xf32>
    %41 = arith.truncf %40 : vector<16x32xf32> to vector<16x32xbf16>
    %c0_18 = arith.constant 0 : index
    %c0_19 = arith.constant 0 : index
    %42 = vector.load %arg6[%c0_18, %c0_19] : memref<32x32xbf16, #tpu.memory_space<vmem>>, vector<32x32xbf16>
    %cst_20 = arith.constant dense<0.000000e+00> : vector<16x32xf32>
    %43 = tpu.matmul %41, %42, %cst_20 {dimension_numbers = #tpu.dot_dimension_numbers<[1], [0], [0], [1], [0, 0, 1, 1], [], []>} : vector<16x32xbf16>, vector<32x32xbf16>, vector<16x32xf32> -> vector<16x32xf32>
    %c0_21 = arith.constant 0 : index
    %c0_22 = arith.constant 0 : index
    %44 = vector.load %arg7[%c0_21, %c0_22] : memref<1x32xf32, #tpu.memory_space<vmem>>, vector<1x32xf32>
    %45 = vector.broadcast %44 : vector<1x32xf32> to vector<16x32xf32>
    %46 = arith.addf %43, %45 : vector<16x32xf32>
    %47 = math.tanh %46 : vector<16x32xf32>
    %48 = arith.truncf %47 : vector<16x32xf32> to vector<16x32xbf16>
    %c0_23 = arith.constant 0 : index
    %c0_24 = arith.constant 0 : index
    %49 = vector.load %arg8[%c0_23, %c0_24] : memref<32x128xbf16, #tpu.memory_space<vmem>>, vector<32x128xbf16>
    %cst_25 = arith.constant dense<0.000000e+00> : vector<16x128xf32>
    %50 = tpu.matmul %48, %49, %cst_25 {dimension_numbers = #tpu.dot_dimension_numbers<[1], [0], [0], [1], [0, 0, 1, 1], [], []>} : vector<16x32xbf16>, vector<32x128xbf16>, vector<16x128xf32> -> vector<16x128xf32>
    %c0_26 = arith.constant 0 : index
    %c0_27 = arith.constant 0 : index
    %51 = vector.load %arg9[%c0_26, %c0_27] : memref<1x128xf32, #tpu.memory_space<vmem>>, vector<1x128xf32>
    %52 = vector.broadcast %51 : vector<1x128xf32> to vector<16x128xf32>
    %53 = arith.addf %50, %52 : vector<16x128xf32>
    %c0_28 = arith.constant 0 : index
    %c0_29 = arith.constant 0 : index
    %54 = vector.load %arg10[%c0_28, %c0_29] : memref<16x128xf32, #tpu.memory_space<vmem>>, vector<16x128xf32>
    tpu.vector_store %arg10[%c0_28, %c0_29], %53 {strides = array<i32>} : memref<16x128xf32, #tpu.memory_space<vmem>>, vector<16x128xf32>,
    return
  }
  func.func @transform_0(%arg0: i32) -> (i32, i32) {
    %c0_i32 = arith.constant 0 : i32
    %c0_i32_0 = arith.constant 0 : i32
    return %arg0, %c0_i32 : i32, i32
  }
  func.func @transform_1(%arg0: i32) -> (i32, i32, i32) {
    %c0_i32 = arith.constant 0 : i32
    %c0_i32_0 = arith.constant 0 : i32
    %c0_i32_1 = arith.constant 0 : i32
    return %arg0, %c0_i32, %c0_i32_0 : i32, i32, i32
  }
  func.func @transform_2(%arg0: i32) -> (i32, i32) {
    %c0_i32 = arith.constant 0 : i32
    %c0_i32_0 = arith.constant 0 : i32
    %c0_i32_1 = arith.constant 0 : i32
    return %c0_i32, %c0_i32_0 : i32, i32
  }
  func.func @transform_3(%arg0: i32) -> (i32, i32) {
    %c0_i32 = arith.constant 0 : i32
    %c0_i32_0 = arith.constant 0 : i32
    %c0_i32_1 = arith.constant 0 : i32
    return %c0_i32, %c0_i32_0 : i32, i32
  }
  func.func @transform_4(%arg0: i32) -> (i32, i32) {
    %c0_i32 = arith.constant 0 : i32
    %c0_i32_0 = arith.constant 0 : i32
    %c0_i32_1 = arith.constant 0 : i32
    return %c0_i32, %c0_i32_0 : i32, i32
  }
  func.func @transform_5(%arg0: i32) -> (i32, i32) {
    %c0_i32 = arith.constant 0 : i32
    %c0_i32_0 = arith.constant 0 : i32
    %c0_i32_1 = arith.constant 0 : i32
    return %c0_i32, %c0_i32_0 : i32, i32
  }
  func.func @transform_6(%arg0: i32) -> (i32, i32) {
    %c0_i32 = arith.constant 0 : i32
    %c0_i32_0 = arith.constant 0 : i32
    %c0_i32_1 = arith.constant 0 : i32
    return %c0_i32, %c0_i32_0 : i32, i32
  }
  func.func @transform_7(%arg0: i32) -> (i32, i32) {
    %c0_i32 = arith.constant 0 : i32
    %c0_i32_0 = arith.constant 0 : i32
    %c0_i32_1 = arith.constant 0 : i32
    return %c0_i32, %c0_i32_0 : i32, i32
  }
  func.func @transform_8(%arg0: i32) -> (i32, i32) {
    %c0_i32 = arith.constant 0 : i32
    %c0_i32_0 = arith.constant 0 : i32
    %c0_i32_1 = arith.constant 0 : i32
    return %c0_i32, %c0_i32_0 : i32, i32
  }
  func.func @transform_9(%arg0: i32) -> (i32, i32) {
    %c0_i32 = arith.constant 0 : i32
    %c0_i32_0 = arith.constant 0 : i32
    return %arg0, %c0_i32 : i32, i32
  }
}

</mosaic_0001>

<llo_original>
// kernel: tpu_custom_call.1
$region0: #{tpu_custom_call.1}
  #allocation0 [shape = 'u32[]', space=smem, size = 0x4, offset = 0x4, fixed_abs, tag = 'smem constant byte address 0x4 - core index']
  #allocation1 [shape = 'u32[72,128]{1,0:T(1,128)}', space=vmem, size = 0x9000, scoped, tag = 'internal scratch']
  %s0 = inlined_call_operand.vmem [shape: s32[16,1], index: 0, kind: input, shape index: {}]
  %s1 = inlined_call_operand.hbm [shape: bf16[16,8,32], index: 1, kind: input, shape index: {}]
  %s2 = inlined_call_operand.vmem [shape: bf16[32,32], index: 2, kind: input, shape index: {}]
  %s3 = inlined_call_operand.hbm [shape: bf16[32,32], index: 3, kind: input, shape index: {}]
  %s4 = inlined_call_operand.hbm [shape: bf16[32,32], index: 4, kind: input, shape index: {}]
  %s5 = inlined_call_operand.hbm [shape: bf16[32,32], index: 5, kind: input, shape index: {}]
  %s6 = inlined_call_operand.vmem [shape: f32[1,32], index: 6, kind: input, shape index: {}]
  %s7 = inlined_call_operand.hbm [shape: bf16[32,128], index: 7, kind: input, shape index: {}]
  %s8 = inlined_call_operand.vmem [shape: f32[1,128], index: 8, kind: input, shape index: {}]
  %s9 = inlined_call_operand.hbm [shape: f32[16,128], index: 9, kind: output, shape index: {}]
  %s10 = sld [smem:[#allocation0]]
  $region66: #{tpu_custom_call.1} parent=0
    _
  %s12 = ssub.s32 1, %s10
  %s13 = scalar_select 0, %s12, %s10
  $region1: #{tpu_custom_call.1} parent=0
    #allocation2 [shape = 'u8[32768]{0}', space=vmem, size = 0x8000, scoped, tag = 'input window, operand 1, single buffered']
    #allocation3 [shape = 's32[1]{0}', space=sflag, size = 0x4, scoped, tag = 'scoped memory for tpu_custom_call.1']
    #allocation4 [shape = 's32[1]{0}', space=sflag, size = 0x4, scoped, tag = 'scoped memory for tpu_custom_call.1']
    #allocation5 [shape = 'u8[8192]{0}', space=vmem, size = 0x2000, scoped, tag = 'input window, operand 3, single buffered']
    #allocation6 [shape = 's32[1]{0}', space=sflag, size = 0x4, scoped, tag = 'scoped memory for tpu_custom_call.1']
    #allocation7 [shape = 'u8[8192]{0}', space=vmem, size = 0x2000, scoped, tag = 'input window, operand 4, single buffered']
    #allocation8 [shape = 'u8[8192]{0}', space=vmem, size = 0x2000, scoped, tag = 'input window, operand 5, single buffered']
    #allocation9 [shape = 's32[1]{0}', space=sflag, size = 0x4, scoped, tag = 'scoped memory for tpu_custom_call.1']
    #allocation10 [shape = 'u8[8192]{0}', space=vmem, size = 0x2000, scoped, tag = 'input window, operand 7, single buffered']
    #allocation11 [shape = 'u8[8192]{0}', space=vmem, size = 0x2000, scoped, tag = 'output window, operand 0, single buffered']
    %14 = vsyncpa [#allocation3], 0
    %15 = vsyncpa [#allocation6], 0
    %16 = vsyncpa [#allocation9], 0
    %17 = vsyncpa [#allocation4], 0
    // Predicated region
    $region2: #{tpu_custom_call.1} parent=1 // pred_check
      _
    $region3: #{tpu_custom_call.1} parent=1 // pred_check_branch
      %19 = sbr.rel (0) target = $region5
    $region4: #{tpu_custom_call.1} parent=1 // pred_region
      _
    $region5: #{tpu_custom_call.1} parent=1 // pred_fallthru
      _
    // Predicated region
    $region6: #{tpu_custom_call.1} parent=1 // pred_check
      _
    $region7: #{tpu_custom_call.1} parent=1 // pred_check_branch
      %21 = sbr.rel (0) target = $region9
    $region8: #{tpu_custom_call.1} parent=1 // pred_region
      %23 = vsyncadd [#allocation3], 0
      %s24 = sshll.u32 %s1, 4
      %s25 = int_to_ptr.hbm [resolvable:$true] %s24
      %s26 = sshll.u32 [#allocation2], 4
      %s27 = int_to_ptr.vmem [resolvable:$true] %s26
      %32 = dma.hbm_to_vmem [thread:$0]  %s25, 1024, %s27, [#allocation3], 64, 64, 4
    $region9: #{tpu_custom_call.1} parent=1 // pred_fallthru
      _
    // Predicated region
    $region10: #{tpu_custom_call.1} parent=1 // pred_check
      _
    $region11: #{tpu_custom_call.1} parent=1 // pred_check_branch
      %34 = sbr.rel (0) target = $region13
    $region12: #{tpu_custom_call.1} parent=1 // pred_region
      _
    $region13: #{tpu_custom_call.1} parent=1 // pred_fallthru
      _
    // Predicated region
    $region14: #{tpu_custom_call.1} parent=1 // pred_check
      _
    $region15: #{tpu_custom_call.1} parent=1 // pred_check_branch
      %36 = sbr.rel (0) target = $region17
    $region16: #{tpu_custom_call.1} parent=1 // pred_region
      %38 = vsyncadd [#allocation6], 0
      %s39 = sshll.u32 %s3, 4
      %s40 = int_to_ptr.hbm [resolvable:$true] %s39
      %s41 = sshll.u32 [#allocation5], 4
      %s42 = int_to_ptr.vmem [resolvable:$true] %s41
      %47 = dma.hbm_to_vmem [thread:$0]  %s40, 256, %s42, [#allocation6], 64, 64, 4
    $region17: #{tpu_custom_call.1} parent=1 // pred_fallthru
      _
    // Predicated region
    $region18: #{tpu_custom_call.1} parent=1 // pred_check
      _
    $region19: #{tpu_custom_call.1} parent=1 // pred_check_branch
      %49 = sbr.rel (0) target = $region21
    $region20: #{tpu_custom_call.1} parent=1 // pred_region
      %51 = vsyncadd [#allocation6], 0
      %s52 = sshll.u32 %s4, 4
      %s53 = int_to_ptr.hbm [resolvable:$true] %s52
      %s54 = sshll.u32 [#allocation7], 4
      %s55 = int_to_ptr.vmem [resolvable:$true] %s54
      %60 = dma.hbm_to_vmem [thread:$0]  %s53, 256, %s55, [#allocation6], 64, 64, 4
    $region21: #{tpu_custom_call.1} parent=1 // pred_fallthru
      _
    // Predicated region
    $region22: #{tpu_custom_call.1} parent=1 // pred_check
      _
    $region23: #{tpu_custom_call.1} parent=1 // pred_check_branch
      %62 = sbr.rel (0) target = $region25
    $region24: #{tpu_custom_call.1} parent=1 // pred_region
      %64 = vsyncadd [#allocation9], 0
      %s65 = sshll.u32 %s5, 4
      %s66 = int_to_ptr.hbm [resolvable:$true] %s65
      %s67 = sshll.u32 [#allocation8], 4
      %s68 = int_to_ptr.vmem [resolvable:$true] %s67
      %73 = dma.hbm_to_vmem [thread:$0]  %s66, 256, %s68, [#allocation9], 64, 64, 4
    $region25: #{tpu_custom_call.1} parent=1 // pred_fallthru
      _
    // Predicated region
    $region26: #{tpu_custom_call.1} parent=1 // pred_check
      _
    $region27: #{tpu_custom_call.1} parent=1 // pred_check_branch
      %75 = sbr.rel (0) target = $region29
    $region28: #{tpu_custom_call.1} parent=1 // pred_region
      _
    $region29: #{tpu_custom_call.1} parent=1 // pred_fallthru
      _
    // Predicated region
    $region30: #{tpu_custom_call.1} parent=1 // pred_check
      _
    $region31: #{tpu_custom_call.1} parent=1 // pred_check_branch
      %77 = sbr.rel (0) target = $region33
    $region32: #{tpu_custom_call.1} parent=1 // pred_region
      %79 = vsyncadd [#allocation9], 0
      %s80 = sshll.u32 %s7, 4
      %s81 = int_to_ptr.hbm [resolvable:$true] %s80
      %s82 = sshll.u32 [#allocation10], 4
      %s83 = int_to_ptr.vmem [resolvable:$true] %s82
      %88 = dma.hbm_to_vmem [thread:$0]  %s81, 256, %s83, [#allocation9], 64, 64, 4
    $region33: #{tpu_custom_call.1} parent=1 // pred_fallthru
      _
    // Predicated region
    $region34: #{tpu_custom_call.1} parent=1 // pred_check
      _
    $region35: #{tpu_custom_call.1} parent=1 // pred_check_branch
      %90 = sbr.rel (0) target = $region37
    $region36: #{tpu_custom_call.1} parent=1 // pred_region
      _
    $region37: #{tpu_custom_call.1} parent=1 // pred_fallthru
      _
    // Predicated region
    $region38: #{tpu_custom_call.1} parent=1 // pred_check
      _
    $region39: #{tpu_custom_call.1} parent=1 // pred_check_branch
      %92 = sbr.rel (0) target = $region41
    $region40: #{tpu_custom_call.1} parent=1 // pred_region
      %94 = dma.done [#allocation3], 1024
    $region41: #{tpu_custom_call.1} parent=1 // pred_fallthru
      _
    // Predicated region
    $region42: #{tpu_custom_call.1} parent=1 // pred_check
      _
    $region43: #{tpu_custom_call.1} parent=1 // pred_check_branch
      %96 = sbr.rel (0) target = $region45
    $region44: #{tpu_custom_call.1} parent=1 // pred_region
      %98 = dma.done [#allocation6], 256
    $region45: #{tpu_custom_call.1} parent=1 // pred_fallthru
      _
    // Predicated region
    $region46: #{tpu_custom_call.1} parent=1 // pred_check
      _
    $region47: #{tpu_custom_call.1} parent=1 // pred_check_branch
      %100 = sbr.rel (0) target = $region49
    $region48: #{tpu_custom_call.1} parent=1 // pred_region
      %102 = dma.done [#allocation6], 256
    $region49: #{tpu_custom_call.1} parent=1 // pred_fallthru
      _
    // Predicated region
    $region50: #{tpu_custom_call.1} parent=1 // pred_check
      _
    $region51: #{tpu_custom_call.1} parent=1 // pred_check_branch
      %104 = sbr.rel (0) target = $region53
    $region52: #{tpu_custom_call.1} parent=1 // pred_region
      %106 = dma.done [#allocation9], 256
    $region53: #{tpu_custom_call.1} parent=1 // pred_fallthru
      _
    // Predicated region
    $region54: #{tpu_custom_call.1} parent=1 // pred_check
      _
    $region55: #{tpu_custom_call.1} parent=1 // pred_check_branch
      %108 = sbr.rel (0) target = $region57
    $region56: #{tpu_custom_call.1} parent=1 // pred_region
      %110 = dma.done [#allocation9], 256
    $region57: #{tpu_custom_call.1} parent=1 // pred_fallthru
      _
    %v112 = vld [vmem:[#allocation2] sm:$0xf]
    %v113 = vld [vmem:[#allocation2 + $0x4] sm:$0xf]
    %v114 = vld [vmem:[#allocation2 + $0x8] sm:$0xf]
    %v115 = vld [vmem:[#allocation2 + $0xc] sm:$0xf]
    %v116 = vld [vmem:[#allocation2 + $0x10] sm:$0xf]
    %v117 = vld [vmem:[#allocation2 + $0x14] sm:$0xf]
    %v118 = vld [vmem:[#allocation2 + $0x18] sm:$0xf]
    %v119 = vld [vmem:[#allocation2 + $0x1c] sm:$0xf]
    %v120 = vld [vmem:[#allocation2 + $0x20] sm:$0xf]
    %v121 = vld [vmem:[#allocation2 + $0x24] sm:$0xf]
    %v122 = vld [vmem:[#allocation2 + $0x28] sm:$0xf]
    %v123 = vld [vmem:[#allocation2 + $0x2c] sm:$0xf]
    %v124 = vld [vmem:[#allocation2 + $0x30] sm:$0xf]
    %v125 = vld [vmem:[#allocation2 + $0x34] sm:$0xf]
    %v126 = vld [vmem:[#allocation2 + $0x38] sm:$0xf]
    %v127 = vld [vmem:[#allocation2 + $0x3c] sm:$0xf]
    %v128 = vlaneseq
    %v129 = vand.u32 %v128, 127
    %v130 = vld [vmem:[%s0] sm:$0xff]
    %v131 = vld [vmem:[%s0 + $0x8] sm:$0xff]
    %132 = vset.pattern.permute.xlu0 0
    %133 = vperm.xlu0 %132, %v130
    %v134 = vpop.permute.xlu0 %133
    %135 = vset.pattern.permute.xlu0 0
    %136 = vperm.xlu0 %135, %v131
    %v137 = vpop.permute.xlu0 %136
    %vm138 = vcmp.lt.s32.totalorder %v129, %v134
    %vm139 = vcmp.lt.s32.totalorder %v129, %v137
    %v140 = vld [vmem:[#allocation5] sm:$0xf]
    %v141 = vld [vmem:[#allocation5 + $0x4] sm:$0xf]
    %v142 = vld [vmem:[#allocation5 + $0x8] sm:$0xf]
    %v143 = vld [vmem:[#allocation5 + $0xc] sm:$0xf]
    %v160 = vunpack.c.l.b16 %v112
    %v161 = vunpack.c.l.b16 %v113
    %v162 = vunpack.c.l.b16 %v114
    %v163 = vunpack.c.l.b16 %v115
    %v164 = vunpack.c.l.b16 %v116
    %v165 = vunpack.c.l.b16 %v117
    %v166 = vunpack.c.l.b16 %v118
    %v167 = vunpack.c.l.b16 %v119
    %v168 = vunpack.c.l.b16 %v120
    %v169 = vunpack.c.l.b16 %v121
    %v170 = vunpack.c.l.b16 %v122
    %v171 = vunpack.c.l.b16 %v123
    %v172 = vunpack.c.l.b16 %v124
    %v173 = vunpack.c.l.b16 %v125
    %v174 = vunpack.c.l.b16 %v126
    %v175 = vunpack.c.l.b16 %v127
    %v176 = vpack.c.b16 %v161, %v160
    %v177 = vpack.c.b16 %v163, %v162
    %v178 = vpack.c.b16 %v165, %v164
    %v179 = vpack.c.b16 %v167, %v166
    %v180 = vpack.c.b16 %v169, %v168
    %v181 = vpack.c.b16 %v171, %v170
    %v182 = vpack.c.b16 %v173, %v172
    %v183 = vpack.c.b16 %v175, %v174
    %v188 = vunpack.c.l.b16 %v140
    %v189 = vunpack.c.l.b16 %v141
    %v190 = vunpack.c.l.b16 %v142
    %v191 = vunpack.c.l.b16 %v143
    %v192 = vpack.c.b16 %v189, %v188
    %v193 = vpack.c.b16 %v191, %v190
    %vm196 = vcmask 261120
    %v198 = vsel %vm196, %v176, 0
    %v201 = vsel %vm196, %v177, 0
    %v204 = vsel %vm196, %v178, 0
    %v207 = vsel %vm196, %v179, 0
    %v210 = vsel %vm196, %v180, 0
    %v213 = vsel %vm196, %v181, 0
    %v216 = vsel %vm196, %v182, 0
    %v219 = vsel %vm196, %v183, 0
    %221 = vmatpush.bf16.msra.mxu0 0
    %222 = vmatpush.bf16.msra.mxu0 0
    %223 = vmatpush.bf16.msra.mxu0 0
    %224 = vmatpush.bf16.msra.mxu0 0
    %225 = vmatpush.bf16.msra.mxu0 0
    %226 = vmatpush.bf16.msra.mxu0 0
    %227 = vmatpush.bf16.msra.mxu0 %v193
    %228 = vmatpush.bf16.msra.mxu0 %v192
    %229 = vmatmul.bf16.gmra.mxu0 %v198
    %v230 = vpop.f32.mrf.mxu0
    %v231 = vadd.f32 0.0, %v230
    %v232 = vpop.f32.mrf.mxu0
    %v233 = vadd.f32 0.0, %v232
    %234 = vmatmul.bf16.gmra.mxu0 %v201
    %v235 = vpop.f32.mrf.mxu0
    %v236 = vadd.f32 0.0, %v235
    %v237 = vpop.f32.mrf.mxu0
    %v238 = vadd.f32 0.0, %v237
    %239 = vmatmul.bf16.gmra.mxu0 %v204
    %v240 = vpop.f32.mrf.mxu0
    %v241 = vadd.f32 0.0, %v240
    %v242 = vpop.f32.mrf.mxu0
    %v243 = vadd.f32 0.0, %v242
    %244 = vmatmul.bf16.gmra.mxu0 %v207
    %v245 = vpop.f32.mrf.mxu0
    %v246 = vadd.f32 0.0, %v245
    %v247 = vpop.f32.mrf.mxu0
    %v248 = vadd.f32 0.0, %v247
    %249 = vmatmul.bf16.gmra.mxu0 %v210
    %v250 = vpop.f32.mrf.mxu0
    %v251 = vadd.f32 0.0, %v250
    %v252 = vpop.f32.mrf.mxu0
    %v253 = vadd.f32 0.0, %v252
    %254 = vmatmul.bf16.gmra.mxu0 %v213
    %v255 = vpop.f32.mrf.mxu0
    %v256 = vadd.f32 0.0, %v255
    %v257 = vpop.f32.mrf.mxu0
    %v258 = vadd.f32 0.0, %v257
    %259 = vmatmul.bf16.gmra.mxu0 %v216
    %v260 = vpop.f32.mrf.mxu0
    %v261 = vadd.f32 0.0, %v260
    %v262 = vpop.f32.mrf.mxu0
    %v263 = vadd.f32 0.0, %v262
    %264 = vmatmul.bf16.gmra.mxu0 %v219
    %v265 = vpop.f32.mrf.mxu0
    %v266 = vadd.f32 0.0, %v265
    %v267 = vpop.f32.mrf.mxu0
    %v268 = vadd.f32 0.0, %v267
    %269 = vdwg.mxu0
    %v270 = vpack.c.bf16 %v231, %v231
    %v271 = vpack.c.bf16 %v233, %v233
    %v272 = vpack.c.bf16 %v236, %v236
    %v273 = vpack.c.bf16 %v238, %v238
    %v274 = vpack.c.bf16 %v241, %v241
    %v275 = vpack.c.bf16 %v243, %v243
    %v276 = vpack.c.bf16 %v246, %v246
    %v277 = vpack.c.bf16 %v248, %v248
    %v278 = vpack.c.bf16 %v251, %v251
    %v279 = vpack.c.bf16 %v253, %v253
    %v280 = vpack.c.bf16 %v256, %v256
    %v281 = vpack.c.bf16 %v258, %v258
    %v282 = vpack.c.bf16 %v261, %v261
    %v283 = vpack.c.bf16 %v263, %v263
    %v284 = vpack.c.bf16 %v266, %v266
    %v285 = vpack.c.bf16 %v268, %v268
    %v286 = vld [vmem:[#allocation7] sm:$0xf]
    %v287 = vld [vmem:[#allocation7 + $0x4] sm:$0xf]
    %v288 = vld [vmem:[#allocation7 + $0x8] sm:$0xf]
    %v289 = vld [vmem:[#allocation7 + $0xc] sm:$0xf]
    %v294 = vunpack.c.l.b16 %v286
    %v295 = vunpack.c.l.b16 %v287
    %v296 = vunpack.c.l.b16 %v288
    %v297 = vunpack.c.l.b16 %v289
    %v298 = vpack.c.b16 %v295, %v294
    %v299 = vpack.c.b16 %v297, %v296
    %302 = vmatpush.bf16.msra.mxu0 0
    %303 = vmatpush.bf16.msra.mxu0 0
    %304 = vmatpush.bf16.msra.mxu0 0
    %305 = vmatpush.bf16.msra.mxu0 0
    %306 = vmatpush.bf16.msra.mxu0 0
    %307 = vmatpush.bf16.msra.mxu0 0
    %308 = vmatpush.bf16.msra.mxu0 %v299
    %309 = vmatpush.bf16.msra.mxu0 %v298
    %310 = vmatmul.bf16.gmra.mxu0 %v198
    %v311 = vpop.f32.mrf.mxu0
    %v312 = vadd.f32 0.0, %v311
    %v313 = vpop.f32.mrf.mxu0
    %v314 = vadd.f32 0.0, %v313
    %315 = vmatmul.bf16.gmra.mxu0 %v201
    %v316 = vpop.f32.mrf.mxu0
    %v317 = vadd.f32 0.0, %v316
    %v318 = vpop.f32.mrf.mxu0
    %v319 = vadd.f32 0.0, %v318
    %320 = vmatmul.bf16.gmra.mxu0 %v204
    %v321 = vpop.f32.mrf.mxu0
    %v322 = vadd.f32 0.0, %v321
    %v323 = vpop.f32.mrf.mxu0
    %v324 = vadd.f32 0.0, %v323
    %325 = vmatmul.bf16.gmra.mxu0 %v207
    %v326 = vpop.f32.mrf.mxu0
    %v327 = vadd.f32 0.0, %v326
    %v328 = vpop.f32.mrf.mxu0
    %v329 = vadd.f32 0.0, %v328
    %330 = vmatmul.bf16.gmra.mxu0 %v210
    %v331 = vpop.f32.mrf.mxu0
    %v332 = vadd.f32 0.0, %v331
    %v333 = vpop.f32.mrf.mxu0
    %v334 = vadd.f32 0.0, %v333
    %335 = vmatmul.bf16.gmra.mxu0 %v213
    %v336 = vpop.f32.mrf.mxu0
    %v337 = vadd.f32 0.0, %v336
    %v338 = vpop.f32.mrf.mxu0
    %v339 = vadd.f32 0.0, %v338
    %340 = vmatmul.bf16.gmra.mxu0 %v216
    %v341 = vpop.f32.mrf.mxu0
    %v342 = vadd.f32 0.0, %v341
    %v343 = vpop.f32.mrf.mxu0
    %v344 = vadd.f32 0.0, %v343
    %345 = vmatmul.bf16.gmra.mxu0 %v219
    %v346 = vpop.f32.mrf.mxu0
    %v347 = vadd.f32 0.0, %v346
    %v348 = vpop.f32.mrf.mxu0
    %v349 = vadd.f32 0.0, %v348
    %350 = vdwg.mxu0
    %v351 = vpack.c.bf16 %v312, %v312
    %v352 = vpack.c.bf16 %v314, %v314
    %v353 = vpack.c.bf16 %v317, %v317
    %v354 = vpack.c.bf16 %v319, %v319
    %v355 = vpack.c.bf16 %v322, %v322
    %v356 = vpack.c.bf16 %v324, %v324
    %v357 = vpack.c.bf16 %v327, %v327
    %v358 = vpack.c.bf16 %v329, %v329
    %v359 = vpack.c.bf16 %v332, %v332
    %v360 = vpack.c.bf16 %v334, %v334
    %v361 = vpack.c.bf16 %v337, %v337
    %v362 = vpack.c.bf16 %v339, %v339
    %v363 = vpack.c.bf16 %v342, %v342
    %v364 = vpack.c.bf16 %v344, %v344
    %v365 = vpack.c.bf16 %v347, %v347
    %v366 = vpack.c.bf16 %v349, %v349
    %v367 = vld [vmem:[%s2] sm:$0xf]
    %v368 = vld [vmem:[%s2 + $0x4] sm:$0xf]
    %v369 = vld [vmem:[%s2 + $0x8] sm:$0xf]
    %v370 = vld [vmem:[%s2 + $0xc] sm:$0xf]
    %v371 = vpack.c.b16 %v160, %v160
    %v372 = vpack.c.b16 %v161, %v161
    %v373 = vpack.c.b16 %v162, %v162
    %v374 = vpack.c.b16 %v163, %v163
    %v375 = vpack.c.b16 %v164, %v164
    %v376 = vpack.c.b16 %v165, %v165
    %v377 = vpack.c.b16 %v166, %v166
    %v378 = vpack.c.b16 %v167, %v167
    %v379 = vpack.c.b16 %v168, %v168
    %v380 = vpack.c.b16 %v169, %v169
    %v381 = vpack.c.b16 %v170, %v170
    %v382 = vpack.c.b16 %v171, %v171
    %v383 = vpack.c.b16 %v172, %v172
    %v384 = vpack.c.b16 %v173, %v173
    %v385 = vpack.c.b16 %v174, %v174
    %v386 = vpack.c.b16 %v175, %v175
    %v387 = vunpack.c.l.b16 %v371
    %v388 = vunpack.c.l.b16 %v372
    %v389 = vunpack.c.l.b16 %v373
    %v390 = vunpack.c.l.b16 %v374
    %v391 = vunpack.c.l.b16 %v375
    %v392 = vunpack.c.l.b16 %v376
    %v393 = vunpack.c.l.b16 %v377
    %v394 = vunpack.c.l.b16 %v378
    %v395 = vunpack.c.l.b16 %v379
    %v396 = vunpack.c.l.b16 %v380
    %v397 = vunpack.c.l.b16 %v381
    %v398 = vunpack.c.l.b16 %v382
    %v399 = vunpack.c.l.b16 %v383
    %v400 = vunpack.c.l.b16 %v384
    %v401 = vunpack.c.l.b16 %v385
    %v402 = vunpack.c.l.b16 %v386
    %v403 = vrot.slane %v388, 7
    %vm404 = vcmask 1041409
    %v405 = vsel %vm404, %v403, %v387
    %v406 = vrot.slane %v389, 6
    %vm407 = vcmask 1042434
    %v408 = vsel %vm407, %v406, %v405
    %v409 = vrot.slane %v390, 5
    %vm410 = vcmask 1043459
    %v411 = vsel %vm410, %v409, %v408
    %v412 = vrot.slane %v391, 4
    %vm413 = vcmask 1044484
    %v414 = vsel %vm413, %v412, %v411
    %v415 = vrot.slane %v392, 3
    %vm416 = vcmask 1045509
    %v417 = vsel %vm416, %v415, %v414
    %v418 = vrot.slane %v393, 2
    %vm419 = vcmask 1046534
    %v420 = vsel %vm419, %v418, %v417
    %v421 = vrot.slane %v394, 1
    %vm422 = vcmask 1047559
    %v423 = vsel %vm422, %v421, %v420
    %v424 = vrot.slane %v396, 7
    %v425 = vsel %vm404, %v424, %v395
    %v426 = vrot.slane %v397, 6
    %v427 = vsel %vm407, %v426, %v425
    %v428 = vrot.slane %v398, 5
    %v429 = vsel %vm410, %v428, %v427
    %v430 = vrot.slane %v399, 4
    %v431 = vsel %vm413, %v430, %v429
    %v432 = vrot.slane %v400, 3
    %v433 = vsel %vm416, %v432, %v431
    %v434 = vrot.slane %v401, 2
    %v435 = vsel %vm419, %v434, %v433
    %v436 = vrot.slane %v402, 1
    %v437 = vsel %vm422, %v436, %v435
    %v438 = vpack.c.b16 %v437, %v423
    %v443 = vunpack.c.l.b16 %v367
    %v444 = vunpack.c.l.b16 %v368
    %v445 = vunpack.c.l.b16 %v369
    %v446 = vunpack.c.l.b16 %v370
    %v447 = vpack.c.b16 %v444, %v443
    %v448 = vpack.c.b16 %v446, %v445
    %v452 = vsel %vm196, %v438, 0
    %454 = vmatpush.bf16.msra.mxu0 0
    %455 = vmatpush.bf16.msra.mxu0 0
    %456 = vmatpush.bf16.msra.mxu0 0
    %457 = vmatpush.bf16.msra.mxu0 0
    %458 = vmatpush.bf16.msra.mxu0 0
    %459 = vmatpush.bf16.msra.mxu0 0
    %460 = vmatpush.bf16.msra.mxu0 %v448
    %461 = vmatpush.bf16.msra.mxu0 %v447
    %462 = vmatmul.bf16.gmra.mxu0 %v452
    %v463 = vpop.f32.mrf.mxu0
    %v464 = vadd.f32 0.0, %v463
    %v465 = vpop.f32.mrf.mxu0
    %v466 = vadd.f32 0.0, %v465
    %467 = vdwg.mxu0
    %v470 = vrot.slane %v464, 1
    %v471 = vrot.slane %v464, 2
    %v472 = vrot.slane %v464, 3
    %v473 = vrot.slane %v464, 4
    %v474 = vrot.slane %v464, 5
    %v475 = vrot.slane %v464, 6
    %v476 = vrot.slane %v464, 7
    %v477 = vrot.slane %v466, 1
    %v478 = vrot.slane %v466, 2
    %v479 = vrot.slane %v466, 3
    %v480 = vrot.slane %v466, 4
    %v481 = vrot.slane %v466, 5
    %v482 = vrot.slane %v466, 6
    %v483 = vrot.slane %v466, 7
    %v484 = vunpack.c.l.bf16 %v270
    %v485 = vunpack.c.l.bf16 %v271
    %v486 = vunpack.c.l.bf16 %v272
    %v487 = vunpack.c.l.bf16 %v273
    %v488 = vunpack.c.l.bf16 %v274
    %v489 = vunpack.c.l.bf16 %v275
    %v490 = vunpack.c.l.bf16 %v276
    %v491 = vunpack.c.l.bf16 %v277
    %v492 = vunpack.c.l.bf16 %v278
    %v493 = vunpack.c.l.bf16 %v279
    %v494 = vunpack.c.l.bf16 %v280
    %v495 = vunpack.c.l.bf16 %v281
    %v496 = vunpack.c.l.bf16 %v282
    %v497 = vunpack.c.l.bf16 %v283
    %v498 = vunpack.c.l.bf16 %v284
    %v499 = vunpack.c.l.bf16 %v285
    %v500 = vperm.slane %v464, 0
    %v501 = vperm.slane %v470, 0
    %v502 = vperm.slane %v471, 0
    %v503 = vperm.slane %v472, 0
    %v504 = vperm.slane %v473, 0
    %v505 = vperm.slane %v474, 0
    %v506 = vperm.slane %v475, 0
    %v507 = vperm.slane %v476, 0
    %v508 = vperm.slane %v466, 0
    %v509 = vperm.slane %v477, 0
    %v510 = vperm.slane %v478, 0
    %v511 = vperm.slane %v479, 0
    %v512 = vperm.slane %v480, 0
    %v513 = vperm.slane %v481, 0
    %v514 = vperm.slane %v482, 0
    %v515 = vperm.slane %v483, 0
    %v532 = vmul.f32 %v500, %v484
    %v533 = vmul.f32 %v501, %v485
    %v534 = vmul.f32 %v502, %v486
    %v535 = vmul.f32 %v503, %v487
    %v536 = vmul.f32 %v504, %v488
    %v537 = vmul.f32 %v505, %v489
    %v538 = vmul.f32 %v506, %v490
    %v539 = vmul.f32 %v507, %v491
    %v540 = vmul.f32 %v508, %v492
    %v541 = vmul.f32 %v509, %v493
    %v542 = vmul.f32 %v510, %v494
    %v543 = vmul.f32 %v511, %v495
    %v544 = vmul.f32 %v512, %v496
    %v545 = vmul.f32 %v513, %v497
    %v546 = vmul.f32 %v514, %v498
    %v547 = vmul.f32 %v515, %v499
    %v548 = vsel %vm196, %v532, 0.0
    %549 = vadd.xlane.f32.xlu0 %v548
    %v550 = vpop.xlane.xlu0 %549
    %v551 = vsel %vm196, %v533, 0.0
    %552 = vadd.xlane.f32.xlu0 %v551
    %v553 = vpop.xlane.xlu0 %552
    %v554 = vsel %vm196, %v534, 0.0
    %555 = vadd.xlane.f32.xlu0 %v554
    %v556 = vpop.xlane.xlu0 %555
    %v557 = vsel %vm196, %v535, 0.0
    %558 = vadd.xlane.f32.xlu0 %v557
    %v559 = vpop.xlane.xlu0 %558
    %v560 = vsel %vm196, %v536, 0.0
    %561 = vadd.xlane.f32.xlu0 %v560
    %v562 = vpop.xlane.xlu0 %561
    %v563 = vsel %vm196, %v537, 0.0
    %564 = vadd.xlane.f32.xlu0 %v563
    %v565 = vpop.xlane.xlu0 %564
    %v566 = vsel %vm196, %v538, 0.0
    %567 = vadd.xlane.f32.xlu0 %v566
    %v568 = vpop.xlane.xlu0 %567
    %v569 = vsel %vm196, %v539, 0.0
    %570 = vadd.xlane.f32.xlu0 %v569
    %v571 = vpop.xlane.xlu0 %570
    %v572 = vsel %vm196, %v540, 0.0
    %573 = vadd.xlane.f32.xlu0 %v572
    %v574 = vpop.xlane.xlu0 %573
    %v575 = vsel %vm196, %v541, 0.0
    %576 = vadd.xlane.f32.xlu0 %v575
    %v577 = vpop.xlane.xlu0 %576
    %v578 = vsel %vm196, %v542, 0.0
    %579 = vadd.xlane.f32.xlu0 %v578
    %v580 = vpop.xlane.xlu0 %579
    %v581 = vsel %vm196, %v543, 0.0
    %582 = vadd.xlane.f32.xlu0 %v581
    %v583 = vpop.xlane.xlu0 %582
    %v584 = vsel %vm196, %v544, 0.0
    %585 = vadd.xlane.f32.xlu0 %v584
    %v586 = vpop.xlane.xlu0 %585
    %v587 = vsel %vm196, %v545, 0.0
    %588 = vadd.xlane.f32.xlu0 %v587
    %v589 = vpop.xlane.xlu0 %588
    %v590 = vsel %vm196, %v546, 0.0
    %591 = vadd.xlane.f32.xlu0 %v590
    %v592 = vpop.xlane.xlu0 %591
    %v593 = vsel %vm196, %v547, 0.0
    %594 = vadd.xlane.f32.xlu0 %v593
    %v595 = vpop.xlane.xlu0 %594
    %v596 = vmul.f32 %v550, 0.17677669
    %v597 = vmul.f32 %v553, 0.17677669
    %v598 = vmul.f32 %v556, 0.17677669
    %v599 = vmul.f32 %v559, 0.17677669
    %v600 = vmul.f32 %v562, 0.17677669
    %v601 = vmul.f32 %v565, 0.17677669
    %v602 = vmul.f32 %v568, 0.17677669
    %v603 = vmul.f32 %v571, 0.17677669
    %v604 = vmul.f32 %v574, 0.17677669
    %v605 = vmul.f32 %v577, 0.17677669
    %v606 = vmul.f32 %v580, 0.17677669
    %v607 = vmul.f32 %v583, 0.17677669
    %v608 = vmul.f32 %v586, 0.17677669
    %v609 = vmul.f32 %v589, 0.17677669
    %v610 = vmul.f32 %v592, 0.17677669
    %v611 = vmul.f32 %v595, 0.17677669
    %v628 = vperm.slane %v596, %v129
    %v629 = vperm.slane %v597, %v129
    %v630 = vperm.slane %v598, %v129
    %v631 = vperm.slane %v599, %v129
    %v632 = vperm.slane %v600, %v129
    %v633 = vperm.slane %v601, %v129
    %v634 = vperm.slane %v602, %v129
    %v635 = vperm.slane %v603, %v129
    %v636 = vperm.slane %v604, %v129
    %v637 = vperm.slane %v605, %v129
    %v638 = vperm.slane %v606, %v129
    %v639 = vperm.slane %v607, %v129
    %v640 = vperm.slane %v608, %v129
    %v641 = vperm.slane %v609, %v129
    %v642 = vperm.slane %v610, %v129
    %v643 = vperm.slane %v611, %v129
    %v644 = vsel %vm404, %v629, %v628
    %v645 = vsel %vm407, %v630, %v644
    %v646 = vsel %vm410, %v631, %v645
    %v647 = vsel %vm413, %v632, %v646
    %v648 = vsel %vm416, %v633, %v647
    %v649 = vsel %vm419, %v634, %v648
    %v650 = vsel %vm422, %v635, %v649
    %v651 = vsel %vm404, %v637, %v636
    %v652 = vsel %vm407, %v638, %v651
    %v653 = vsel %vm410, %v639, %v652
    %v654 = vsel %vm413, %v640, %v653
    %v655 = vsel %vm416, %v641, %v654
    %v656 = vsel %vm419, %v642, %v655
    %v657 = vsel %vm422, %v643, %v656
    %v660 = vsel %vm138, %v650, -1e+30
    %v661 = vsel %vm139, %v657, -1e+30
    %vm662 = vcmask 64512
    %v663 = vsel %vm662, %v660, -inf
    %664 = vmax.xlane.f32.xlu0 %v663
    %v665 = vpop.xlane.xlu0 %664
    %v666 = vsel %vm662, %v661, -inf
    %667 = vmax.xlane.f32.xlu0 %v666
    %v668 = vpop.xlane.xlu0 %667
    %v669 = vsub.f32 %v660, %v665
    %v670 = vsub.f32 %v661, %v668
    %v671 = vmul.f32 %v669, 1.442695
    %v672 = vpow.pop %v671
    %v673 = vmul.f32 %v670, 1.442695
    %v674 = vpow.pop %v673
    %v675 = vsel %vm662, %v672, 0.0
    %676 = vadd.xlane.f32.xlu0 %v675
    %v677 = vpop.xlane.xlu0 %676
    %v678 = vsel %vm662, %v674, 0.0
    %679 = vadd.xlane.f32.xlu0 %v678
    %v680 = vpop.xlane.xlu0 %679
    %v681 = vrcp.pop %v677
    %v682 = vrcp.pop %v680
    %v683 = vmul.f32 %v672, %v681
    %v684 = vmul.f32 %v674, %v682
    %v687 = vrot.slane %v683, 1
    %v688 = vrot.slane %v683, 2
    %v689 = vrot.slane %v683, 3
    %v690 = vrot.slane %v683, 4
    %v691 = vrot.slane %v683, 5
    %v692 = vrot.slane %v683, 6
    %v693 = vrot.slane %v683, 7
    %v694 = vrot.slane %v684, 1
    %v695 = vrot.slane %v684, 2
    %v696 = vrot.slane %v684, 3
    %v697 = vrot.slane %v684, 4
    %v698 = vrot.slane %v684, 5
    %v699 = vrot.slane %v684, 6
    %v700 = vrot.slane %v684, 7
    %v715 = vpack.c.bf16 %v683, %v683
    %v716 = vpack.c.bf16 %v687, %v687
    %v717 = vpack.c.bf16 %v688, %v688
    %v718 = vpack.c.bf16 %v689, %v689
    %v719 = vpack.c.bf16 %v690, %v690
    %v720 = vpack.c.bf16 %v691, %v691
    %v721 = vpack.c.bf16 %v692, %v692
    %v722 = vpack.c.bf16 %v693, %v693
    %v723 = vpack.c.bf16 %v684, %v684
    %v724 = vpack.c.bf16 %v694, %v694
    %v725 = vpack.c.bf16 %v695, %v695
    %v726 = vpack.c.bf16 %v696, %v696
    %v727 = vpack.c.bf16 %v697, %v697
    %v728 = vpack.c.bf16 %v698, %v698
    %v729 = vpack.c.bf16 %v699, %v699
    %v730 = vpack.c.bf16 %v700, %v700
    %v732 = vsel %vm662, %v715, 0
    %vm734 = vcmask 1043456
    %v736 = vsel %vm734, %v351, 0
    %738 = vmatpush.bf16.msra.mxu0 0
    %739 = vmatpush.bf16.msra.mxu0 0
    %740 = vmatpush.bf16.msra.mxu0 0
    %741 = vmatpush.bf16.msra.mxu0 0
    %742 = vmatpush.bf16.msra.mxu0 0
    %743 = vmatpush.bf16.msra.mxu0 0
    %744 = vmatpush.bf16.msra.mxu0 0
    %745 = vmatpush.bf16.msra.mxu0 %v736
    %746 = vmatmul.bf16.gmra.mxu0 %v732
    %v747 = vpop.f32.mrf.mxu0
    %v748 = vadd.f32 0.0, %v747
    %v749 = vpop.f32.mrf.mxu0
    %750 = vdwg.mxu0
    %v752 = vsel %vm662, %v716, 0
    %v755 = vsel %vm734, %v352, 0
    %757 = vmatpush.bf16.msra.mxu0 0
    %758 = vmatpush.bf16.msra.mxu0 0
    %759 = vmatpush.bf16.msra.mxu0 0
    %760 = vmatpush.bf16.msra.mxu0 0
    %761 = vmatpush.bf16.msra.mxu0 0
    %762 = vmatpush.bf16.msra.mxu0 0
    %763 = vmatpush.bf16.msra.mxu0 0
    %764 = vmatpush.bf16.msra.mxu0 %v755
    %765 = vmatmul.bf16.gmra.mxu0 %v752
    %v766 = vpop.f32.mrf.mxu0
    %v767 = vadd.f32 0.0, %v766
    %v768 = vpop.f32.mrf.mxu0
    %769 = vdwg.mxu0
    %v771 = vsel %vm662, %v717, 0
    %v774 = vsel %vm734, %v353, 0
    %776 = vmatpush.bf16.msra.mxu0 0
    %777 = vmatpush.bf16.msra.mxu0 0
    %778 = vmatpush.bf16.msra.mxu0 0
    %779 = vmatpush.bf16.msra.mxu0 0
    %780 = vmatpush.bf16.msra.mxu0 0
    %781 = vmatpush.bf16.msra.mxu0 0
    %782 = vmatpush.bf16.msra.mxu0 0
    %783 = vmatpush.bf16.msra.mxu0 %v774
    %784 = vmatmul.bf16.gmra.mxu0 %v771
    %v785 = vpop.f32.mrf.mxu0
    %v786 = vadd.f32 0.0, %v785
    %v787 = vpop.f32.mrf.mxu0
    %788 = vdwg.mxu0
    %v790 = vsel %vm662, %v718, 0
    %v793 = vsel %vm734, %v354, 0
    %795 = vmatpush.bf16.msra.mxu0 0
    %796 = vmatpush.bf16.msra.mxu0 0
    %797 = vmatpush.bf16.msra.mxu0 0
    %798 = vmatpush.bf16.msra.mxu0 0
    %799 = vmatpush.bf16.msra.mxu0 0
    %800 = vmatpush.bf16.msra.mxu0 0
    %801 = vmatpush.bf16.msra.mxu0 0
    %802 = vmatpush.bf16.msra.mxu0 %v793
    %803 = vmatmul.bf16.gmra.mxu0 %v790
    %v804 = vpop.f32.mrf.mxu0
    %v805 = vadd.f32 0.0, %v804
    %v806 = vpop.f32.mrf.mxu0
    %807 = vdwg.mxu0
    %v809 = vsel %vm662, %v719, 0
    %v812 = vsel %vm734, %v355, 0
    %814 = vmatpush.bf16.msra.mxu0 0
    %815 = vmatpush.bf16.msra.mxu0 0
    %816 = vmatpush.bf16.msra.mxu0 0
    %817 = vmatpush.bf16.msra.mxu0 0
    %818 = vmatpush.bf16.msra.mxu0 0
    %819 = vmatpush.bf16.msra.mxu0 0
    %820 = vmatpush.bf16.msra.mxu0 0
    %821 = vmatpush.bf16.msra.mxu0 %v812
    %822 = vmatmul.bf16.gmra.mxu0 %v809
    %v823 = vpop.f32.mrf.mxu0
    %v824 = vadd.f32 0.0, %v823
    %v825 = vpop.f32.mrf.mxu0
    %826 = vdwg.mxu0
    %v828 = vsel %vm662, %v720, 0
    %v831 = vsel %vm734, %v356, 0
    %833 = vmatpush.bf16.msra.mxu0 0
    %834 = vmatpush.bf16.msra.mxu0 0
    %835 = vmatpush.bf16.msra.mxu0 0
    %836 = vmatpush.bf16.msra.mxu0 0
    %837 = vmatpush.bf16.msra.mxu0 0
    %838 = vmatpush.bf16.msra.mxu0 0
    %839 = vmatpush.bf16.msra.mxu0 0
    %840 = vmatpush.bf16.msra.mxu0 %v831
    %841 = vmatmul.bf16.gmra.mxu0 %v828
    %v842 = vpop.f32.mrf.mxu0
    %v843 = vadd.f32 0.0, %v842
    %v844 = vpop.f32.mrf.mxu0
    %845 = vdwg.mxu0
    %v847 = vsel %vm662, %v721, 0
    %v850 = vsel %vm734, %v357, 0
    %852 = vmatpush.bf16.msra.mxu0 0
    %853 = vmatpush.bf16.msra.mxu0 0
    %854 = vmatpush.bf16.msra.mxu0 0
    %855 = vmatpush.bf16.msra.mxu0 0
    %856 = vmatpush.bf16.msra.mxu0 0
    %857 = vmatpush.bf16.msra.mxu0 0
    %858 = vmatpush.bf16.msra.mxu0 0
    %859 = vmatpush.bf16.msra.mxu0 %v850
    %860 = vmatmul.bf16.gmra.mxu0 %v847
    %v861 = vpop.f32.mrf.mxu0
    %v862 = vadd.f32 0.0, %v861
    %v863 = vpop.f32.mrf.mxu0
    %864 = vdwg.mxu0
    %v866 = vsel %vm662, %v722, 0
    %v869 = vsel %vm734, %v358, 0
    %871 = vmatpush.bf16.msra.mxu0 0
    %872 = vmatpush.bf16.msra.mxu0 0
    %873 = vmatpush.bf16.msra.mxu0 0
    %874 = vmatpush.bf16.msra.mxu0 0
    %875 = vmatpush.bf16.msra.mxu0 0
    %876 = vmatpush.bf16.msra.mxu0 0
    %877 = vmatpush.bf16.msra.mxu0 0
    %878 = vmatpush.bf16.msra.mxu0 %v869
    %879 = vmatmul.bf16.gmra.mxu0 %v866
    %v880 = vpop.f32.mrf.mxu0
    %v881 = vadd.f32 0.0, %v880
    %v882 = vpop.f32.mrf.mxu0
    %883 = vdwg.mxu0
    %v885 = vsel %vm662, %v723, 0
    %v888 = vsel %vm734, %v359, 0
    %890 = vmatpush.bf16.msra.mxu0 0
    %891 = vmatpush.bf16.msra.mxu0 0
    %892 = vmatpush.bf16.msra.mxu0 0
    %893 = vmatpush.bf16.msra.mxu0 0
    %894 = vmatpush.bf16.msra.mxu0 0
    %895 = vmatpush.bf16.msra.mxu0 0
    %896 = vmatpush.bf16.msra.mxu0 0
    %897 = vmatpush.bf16.msra.mxu0 %v888
    %898 = vmatmul.bf16.gmra.mxu0 %v885
    %v899 = vpop.f32.mrf.mxu0
    %v900 = vadd.f32 0.0, %v899
    %v901 = vpop.f32.mrf.mxu0
    %902 = vdwg.mxu0
    %v904 = vsel %vm662, %v724, 0
    %v907 = vsel %vm734, %v360, 0
    %909 = vmatpush.bf16.msra.mxu0 0
    %910 = vmatpush.bf16.msra.mxu0 0
    %911 = vmatpush.bf16.msra.mxu0 0
    %912 = vmatpush.bf16.msra.mxu0 0
    %913 = vmatpush.bf16.msra.mxu0 0
    %914 = vmatpush.bf16.msra.mxu0 0
    %915 = vmatpush.bf16.msra.mxu0 0
    %916 = vmatpush.bf16.msra.mxu0 %v907
    %917 = vmatmul.bf16.gmra.mxu0 %v904
    %v918 = vpop.f32.mrf.mxu0
    %v919 = vadd.f32 0.0, %v918
    %v920 = vpop.f32.mrf.mxu0
    %921 = vdwg.mxu0
    %v923 = vsel %vm662, %v725, 0
    %v926 = vsel %vm734, %v361, 0
    %928 = vmatpush.bf16.msra.mxu0 0
    %929 = vmatpush.bf16.msra.mxu0 0
    %930 = vmatpush.bf16.msra.mxu0 0
    %931 = vmatpush.bf16.msra.mxu0 0
    %932 = vmatpush.bf16.msra.mxu0 0
    %933 = vmatpush.bf16.msra.mxu0 0
    %934 = vmatpush.bf16.msra.mxu0 0
    %935 = vmatpush.bf16.msra.mxu0 %v926
    %936 = vmatmul.bf16.gmra.mxu0 %v923
    %v937 = vpop.f32.mrf.mxu0
    %v938 = vadd.f32 0.0, %v937
    %v939 = vpop.f32.mrf.mxu0
    %940 = vdwg.mxu0
    %v942 = vsel %vm662, %v726, 0
    %v945 = vsel %vm734, %v362, 0
    %947 = vmatpush.bf16.msra.mxu0 0
    %948 = vmatpush.bf16.msra.mxu0 0
    %949 = vmatpush.bf16.msra.mxu0 0
    %950 = vmatpush.bf16.msra.mxu0 0
    %951 = vmatpush.bf16.msra.mxu0 0
    %952 = vmatpush.bf16.msra.mxu0 0
    %953 = vmatpush.bf16.msra.mxu0 0
    %954 = vmatpush.bf16.msra.mxu0 %v945
    %955 = vmatmul.bf16.gmra.mxu0 %v942
    %v956 = vpop.f32.mrf.mxu0
    %v957 = vadd.f32 0.0, %v956
    %v958 = vpop.f32.mrf.mxu0
    %959 = vdwg.mxu0
    %v961 = vsel %vm662, %v727, 0
    %v964 = vsel %vm734, %v363, 0
    %966 = vmatpush.bf16.msra.mxu0 0
    %967 = vmatpush.bf16.msra.mxu0 0
    %968 = vmatpush.bf16.msra.mxu0 0
    %969 = vmatpush.bf16.msra.mxu0 0
    %970 = vmatpush.bf16.msra.mxu0 0
    %971 = vmatpush.bf16.msra.mxu0 0
    %972 = vmatpush.bf16.msra.mxu0 0
    %973 = vmatpush.bf16.msra.mxu0 %v964
    %974 = vmatmul.bf16.gmra.mxu0 %v961
    %v975 = vpop.f32.mrf.mxu0
    %v976 = vadd.f32 0.0, %v975
    %v977 = vpop.f32.mrf.mxu0
    %978 = vdwg.mxu0
    %v980 = vsel %vm662, %v728, 0
    %v983 = vsel %vm734, %v364, 0
    %985 = vmatpush.bf16.msra.mxu0 0
    %986 = vmatpush.bf16.msra.mxu0 0
    %987 = vmatpush.bf16.msra.mxu0 0
    %988 = vmatpush.bf16.msra.mxu0 0
    %989 = vmatpush.bf16.msra.mxu0 0
    %990 = vmatpush.bf16.msra.mxu0 0
    %991 = vmatpush.bf16.msra.mxu0 0
    %992 = vmatpush.bf16.msra.mxu0 %v983
    %993 = vmatmul.bf16.gmra.mxu0 %v980
    %v994 = vpop.f32.mrf.mxu0
    %v995 = vadd.f32 0.0, %v994
    %v996 = vpop.f32.mrf.mxu0
    %997 = vdwg.mxu0
    %v999 = vsel %vm662, %v729, 0
    %v1002 = vsel %vm734, %v365, 0
    %1004 = vmatpush.bf16.msra.mxu0 0
    %1005 = vmatpush.bf16.msra.mxu0 0
    %1006 = vmatpush.bf16.msra.mxu0 0
    %1007 = vmatpush.bf16.msra.mxu0 0
    %1008 = vmatpush.bf16.msra.mxu0 0
    %1009 = vmatpush.bf16.msra.mxu0 0
    %1010 = vmatpush.bf16.msra.mxu0 0
    %1011 = vmatpush.bf16.msra.mxu0 %v1002
    %1012 = vmatmul.bf16.gmra.mxu0 %v999
    %v1013 = vpop.f32.mrf.mxu0
    %v1014 = vadd.f32 0.0, %v1013
    %v1015 = vpop.f32.mrf.mxu0
    %1016 = vdwg.mxu0
    %v1018 = vsel %vm662, %v730, 0
    %v1021 = vsel %vm734, %v366, 0
    %1023 = vmatpush.bf16.msra.mxu0 0
    %1024 = vmatpush.bf16.msra.mxu0 0
    %1025 = vmatpush.bf16.msra.mxu0 0
    %1026 = vmatpush.bf16.msra.mxu0 0
    %1027 = vmatpush.bf16.msra.mxu0 0
    %1028 = vmatpush.bf16.msra.mxu0 0
    %1029 = vmatpush.bf16.msra.mxu0 0
    %1030 = vmatpush.bf16.msra.mxu0 %v1021
    %1031 = vmatmul.bf16.gmra.mxu0 %v1018
    %v1032 = vpop.f32.mrf.mxu0
    %v1033 = vadd.f32 0.0, %v1032
    %v1034 = vpop.f32.mrf.mxu0
    %1035 = vdwg.mxu0
    %v1036 = vpack.c.bf16 %v748, %v748
    %v1037 = vpack.c.bf16 %v767, %v767
    %v1038 = vpack.c.bf16 %v786, %v786
    %v1039 = vpack.c.bf16 %v805, %v805
    %v1040 = vpack.c.bf16 %v824, %v824
    %v1041 = vpack.c.bf16 %v843, %v843
    %v1042 = vpack.c.bf16 %v862, %v862
    %v1043 = vpack.c.bf16 %v881, %v881
    %v1044 = vpack.c.bf16 %v900, %v900
    %v1045 = vpack.c.bf16 %v919, %v919
    %v1046 = vpack.c.bf16 %v938, %v938
    %v1047 = vpack.c.bf16 %v957, %v957
    %v1048 = vpack.c.bf16 %v976, %v976
    %v1049 = vpack.c.bf16 %v995, %v995
    %v1050 = vpack.c.bf16 %v1014, %v1014
    %v1051 = vpack.c.bf16 %v1033, %v1033
    %v1052 = vld [vmem:[#allocation8] sm:$0xf]
    %v1053 = vld [vmem:[#allocation8 + $0x4] sm:$0xf]
    %v1054 = vld [vmem:[#allocation8 + $0x8] sm:$0xf]
    %v1055 = vld [vmem:[#allocation8 + $0xc] sm:$0xf]
    %v1056 = vld [vmem:[%s6] sm:$0x1]
    %v1058 = vperm.slane %v1056, 0
    %v1076 = vunpack.c.l.b16 %v1036
    %v1077 = vunpack.c.l.b16 %v1037
    %v1078 = vunpack.c.l.b16 %v1038
    %v1079 = vunpack.c.l.b16 %v1039
    %v1080 = vunpack.c.l.b16 %v1040
    %v1081 = vunpack.c.l.b16 %v1041
    %v1082 = vunpack.c.l.b16 %v1042
    %v1083 = vunpack.c.l.b16 %v1043
    %v1084 = vunpack.c.l.b16 %v1044
    %v1085 = vunpack.c.l.b16 %v1045
    %v1086 = vunpack.c.l.b16 %v1046
    %v1087 = vunpack.c.l.b16 %v1047
    %v1088 = vunpack.c.l.b16 %v1048
    %v1089 = vunpack.c.l.b16 %v1049
    %v1090 = vunpack.c.l.b16 %v1050
    %v1091 = vunpack.c.l.b16 %v1051
    %v1092 = vrot.slane %v1077, 7
    %v1093 = vsel %vm404, %v1092, %v1076
    %v1094 = vrot.slane %v1078, 6
    %v1095 = vsel %vm407, %v1094, %v1093
    %v1096 = vrot.slane %v1079, 5
    %v1097 = vsel %vm410, %v1096, %v1095
    %v1098 = vrot.slane %v1080, 4
    %v1099 = vsel %vm413, %v1098, %v1097
    %v1100 = vrot.slane %v1081, 3
    %v1101 = vsel %vm416, %v1100, %v1099
    %v1102 = vrot.slane %v1082, 2
    %v1103 = vsel %vm419, %v1102, %v1101
    %v1104 = vrot.slane %v1083, 1
    %v1105 = vsel %vm422, %v1104, %v1103
    %v1106 = vrot.slane %v1085, 7
    %v1107 = vsel %vm404, %v1106, %v1084
    %v1108 = vrot.slane %v1086, 6
    %v1109 = vsel %vm407, %v1108, %v1107
    %v1110 = vrot.slane %v1087, 5
    %v1111 = vsel %vm410, %v1110, %v1109
    %v1112 = vrot.slane %v1088, 4
    %v1113 = vsel %vm413, %v1112, %v1111
    %v1114 = vrot.slane %v1089, 3
    %v1115 = vsel %vm416, %v1114, %v1113
    %v1116 = vrot.slane %v1090, 2
    %v1117 = vsel %vm419, %v1116, %v1115
    %v1118 = vrot.slane %v1091, 1
    %v1119 = vsel %vm422, %v1118, %v1117
    %v1120 = vpack.c.b16 %v1119, %v1105
    %v1125 = vunpack.c.l.b16 %v1052
    %v1126 = vunpack.c.l.b16 %v1053
    %v1127 = vunpack.c.l.b16 %v1054
    %v1128 = vunpack.c.l.b16 %v1055
    %v1129 = vpack.c.b16 %v1126, %v1125
    %v1130 = vpack.c.b16 %v1128, %v1127
    %v1134 = vsel %vm196, %v1120, 0
    %1136 = vmatpush.bf16.msra.mxu0 0
    %1137 = vmatpush.bf16.msra.mxu0 0
    %1138 = vmatpush.bf16.msra.mxu0 0
    %1139 = vmatpush.bf16.msra.mxu0 0
    %1140 = vmatpush.bf16.msra.mxu0 0
    %1141 = vmatpush.bf16.msra.mxu0 0
    %1142 = vmatpush.bf16.msra.mxu0 %v1130
    %1143 = vmatpush.bf16.msra.mxu0 %v1129
    %1144 = vmatmul.bf16.gmra.mxu0 %v1134
    %v1145 = vpop.f32.mrf.mxu0
    %v1146 = vadd.f32 %v1058, %v1145
    %v1147 = vpop.f32.mrf.mxu0
    %v1148 = vadd.f32 %v1058, %v1147
    %1149 = vdwg.mxu0
    %v1150 = vtanh.pop %v1146
    %v1151 = vtanh.pop %v1148
    %v1152 = vpack.c.bf16 %v1151, %v1150
    %v1153 = vld [vmem:[#allocation10] sm:$0xf]
    %v1154 = vld [vmem:[#allocation10 + $0x4] sm:$0xf]
    %v1155 = vld [vmem:[#allocation10 + $0x8] sm:$0xf]
    %v1156 = vld [vmem:[#allocation10 + $0xc] sm:$0xf]
    %v1157 = vld [vmem:[%s8] sm:$0x1]
    %v1159 = vperm.slane %v1157, 0
    %v1165 = vunpack.c.l.b16 %v1153
    %v1166 = vunpack.c.l.b16 %v1154
    %v1167 = vunpack.c.l.b16 %v1155
    %v1168 = vunpack.c.l.b16 %v1156
    %v1169 = vpack.c.b16 %v1166, %v1165
    %v1170 = vpack.c.b16 %v1168, %v1167
    %v1174 = vsel %vm196, %v1152, 0
    %1176 = vmatpush.bf16.msra.mxu0 0
    %1177 = vmatpush.bf16.msra.mxu0 0
    %1178 = vmatpush.bf16.msra.mxu0 0
    %1179 = vmatpush.bf16.msra.mxu0 0
    %1180 = vmatpush.bf16.msra.mxu0 0
    %1181 = vmatpush.bf16.msra.mxu0 0
    %1182 = vmatpush.bf16.msra.mxu0 %v1170
    %1183 = vmatpush.bf16.msra.mxu0 %v1169
    %1184 = vmatmul.bf16.gmra.mxu0 %v1174
    %v1185 = vpop.f32.mrf.mxu0
    %v1186 = vadd.f32 %v1159, %v1185
    %v1187 = vpop.f32.mrf.mxu0
    %v1188 = vadd.f32 %v1159, %v1187
    %1189 = vdwg.mxu0
    %1190 = vst [vmem:[#allocation11] sm:$0xff] %v1186
    %1191 = vst [vmem:[#allocation11 + $0x8] sm:$0xff] %v1188
    // Predicated region
    $region58: #{tpu_custom_call.1} parent=1 // pred_check
      _
    $region59: #{tpu_custom_call.1} parent=1 // pred_check_branch
      %1193 = sbr.rel (0) target = $region61
    $region60: #{tpu_custom_call.1} parent=1 // pred_region
      %1195 = vsyncadd [#allocation4], 0
      %s1196 = sshll.u32 [#allocation11], 4
      %s1197 = int_to_ptr.vmem [resolvable:$true] %s1196
      %s1198 = sshll.u32 %s9, 4
      %s1199 = int_to_ptr.hbm [resolvable:$true] %s1198
      %1204 = dma.vmem_to_hbm [thread:$0]  %s1197, 256, %s1199, [#allocation4], 128, 128, 8
    $region61: #{tpu_custom_call.1} parent=1 // pred_fallthru
      _
    // Predicated region
    $region62: #{tpu_custom_call.1} parent=1 // pred_check
      _
    $region63: #{tpu_custom_call.1} parent=1 // pred_check_branch
      %1206 = sbr.rel (0) target = $region65
    $region64: #{tpu_custom_call.1} parent=1 // pred_region
      %1208 = dma.done [#allocation4], 256
    $region65: #{tpu_custom_call.1} parent=1 // pred_fallthru
      _
    %1209 = vsyncpa [#allocation3], 1
    %1210 = vsyncpa [#allocation6], 1
    %1211 = vsyncpa [#allocation9], 1
    %1212 = vsyncpa [#allocation4], 1

</llo_original>
